<compile_context>
chip_gen: v7x
topology: tpu7x:2x2x1
jax: 0.10.0
libtpu: 0.0.40
codegen_flags: <defaults>
</compile_context>

<pallas_src>
import functools
import math

import numpy as np

import jax
import jax.numpy as jnp
from jax import lax
from jax.experimental import pallas as pl
from jax.experimental.pallas import tpu as pltpu


# ---------------------------------------------------------------------------
# Kernel
# ---------------------------------------------------------------------------
def _qkv_attention_kernel(q_ref, k_ref, v_ref, o_ref, m_sc, l_sc, acc_sc, *,
                          hb, ch, scale_sq, mxu_dtype, exp_dtype,
                          kv_mask, t_total):
    """One (batch, head-block, q-tile, kv-tile) grid step.

    q_ref: (1, hb*ch, tq)   k_ref/v_ref: (1, hb*ch, tk)   o_ref: (1, hb*ch, tq)
    m_sc/l_sc: (hb, tq, 1) f32   acc_sc: (hb, tq, ch) f32   (persist across kv)
    """
    ki = pl.program_id(3)
    tq = q_ref.shape[2]
    tk = k_ref.shape[2]

    @pl.when(ki == 0)
    def _init():
        m_sc[...] = jnp.full(m_sc.shape, -jnp.inf, dtype=m_sc.dtype)
        l_sc[...] = jnp.zeros(l_sc.shape, dtype=l_sc.dtype)
        acc_sc[...] = jnp.zeros(acc_sc.shape, dtype=acc_sc.dtype)

    # Fold the combined softmax scale (1/sqrt(ch) == PyTorch's split 1/ch**0.25
    # on q and k) into the small q tile: touches hb*ch*tq elements instead of
    # the hb*tq*T logits.
    q = q_ref[0].reshape(hb, ch, tq) * scale_sq
    k = k_ref[0].reshape(hb, ch, tk)
    if q.dtype != mxu_dtype:
        q = q.astype(mxu_dtype)
    if k.dtype != mxu_dtype:
        k = k.astype(mxu_dtype)

    # logits[h, t, s] = sum_c q[h, c, t] * k[h, c, s]   (batched over heads;
    # contraction expressed via dimension numbers — no materialized transpose).
    s = lax.dot_general(q, k, (((1,), (1,)), ((0,), (0,))),
                        preferred_element_type=jnp.float32)       # (hb, tq, tk)

    valid = None
    if kv_mask:  # static flag: only when the last kv tile sticks out past T
        col = ki * tk + lax.broadcasted_iota(jnp.int32, (1, 1, tk), 2)
        valid = col < t_total
        s = jnp.where(valid, s, -jnp.inf)

    # Online softmax (running max / denominator kept in f32).
    m_prev = m_sc[...]
    m_new = jnp.maximum(m_prev, jnp.max(s, axis=-1, keepdims=True))  # (hb,tq,1)
    alpha = jnp.exp(m_prev - m_new)                                  # (hb,tq,1)
    # exp in bf16 on chips with a bf16 EUP (v6e/v7x): p is produced directly in
    # the MXU input dtype; stays f32 on v5e.
    p = jnp.exp((s - m_new).astype(exp_dtype))                       # (hb,tq,tk)
    l_sc[...] = alpha * l_sc[...] + jnp.sum(p, axis=-1, keepdims=True,
                                            dtype=jnp.float32)
    m_sc[...] = m_new

    v = v_ref[0].reshape(hb, ch, tk)
    if kv_mask:
        # Padded K/V columns may hold arbitrary bits (possibly inf/NaN); zero
        # them so 0-weight * garbage cannot poison the accumulator.
        v = jnp.where(valid, v, 0)
    if v.dtype != mxu_dtype:
        v = v.astype(mxu_dtype)
    if p.dtype != mxu_dtype:
        p = p.astype(mxu_dtype)
    # pv[h, t, c] = sum_s p[h, t, s] * v[h, c, s]
    pv = lax.dot_general(p, v, (((2,), (2,)), ((0,), (0,))),
                         preferred_element_type=jnp.float32)         # (hb,tq,ch)
    acc_sc[...] = alpha * acc_sc[...] + pv

    @pl.when(ki == pl.num_programs(3) - 1)
    def _finalize():
        # Normalize AFTER the PV matmul: hb*tq*ch elements instead of hb*tq*T.
        inv_l = pl.reciprocal(l_sc[...], approx=True)                # (hb,tq,1)
        out = acc_sc[...] * inv_l                                    # (hb,tq,ch)
        out = jnp.transpose(out, (0, 2, 1)).reshape(hb * ch, tq)
        o_ref[0] = out.astype(o_ref.dtype)


# ---------------------------------------------------------------------------
# Tile planning
# ---------------------------------------------------------------------------
def _round_up(x, m):
    return (x + m - 1) // m * m


def _chip_caps():
    """Returns (has_bf16_eup, physical VMEM bytes); conservative defaults."""
    kind = ""
    try:
        kind = jax.devices()[0].device_kind.lower()
    except Exception:
        pass
    has_bf16_eup = any(t in kind for t in ("v6", "v7", "7x"))
    try:
        vmem_cap = int(pltpu.get_tpu_info().vmem_capacity_bytes)
    except Exception:
        vmem_cap = 0
    if vmem_cap <= 0:
        vmem_cap = 64 * 1024 * 1024
    return has_bf16_eup, vmem_cap


def _tq_candidates(t):
    if t < 128:
        return [t]
    cands = [c for c in (1024, 512, 256, 128) if c <= t]
    if t % 128 == 0 and t <= 1024 and t not in cands:
        cands.insert(0, t)
    return cands


def _vmem_usage(hb, ch, tq, tk, itemsize, exp_itemsize):
    blk_c = hb * ch
    bufs = 2 * blk_c * tq * itemsize                 # q (double-buffered)
    bufs += 2 * blk_c * tq * itemsize                # out
    bufs += 2 * 2 * blk_c * tk * itemsize            # k + v
    scratch = 2 * hb * _round_up(tq, 8) * 128 * 4              # m, l (lane-padded)
    scratch += hb * _round_up(tq, 8) * _round_up(ch, 128) * 4  # acc
    temps = hb * tq * tk * (4 + 4 + exp_itemsize)    # logits, shifted, p
    return bufs + scratch + temps


def _plan_tiles(n_heads, ch, t, itemsize, exp_itemsize, vmem_limit):
    """Pick (heads-per-block, q tile, kv tile) under the VMEM budget.

    Preference: full-T resident K/V (tk == T) with the largest aligned head
    block, shrinking tq first, then hb; only then kv tiling (flash).  Returns
    None when no sublane-aligned head block exists (caller falls back to XLA).
    """
    sublane = 8 if itemsize >= 4 else (16 if itemsize == 2 else 32)
    small_vmem = vmem_limit < 80 * 1024 * 1024          # ~v7x territory
    blk_c_cap = 256 if small_vmem else 512

    aligned = [h for h in range(n_heads, 0, -1)
               if n_heads % h == 0 and (h * ch) % sublane == 0 and ch % 8 == 0]
    hbs = [h for h in aligned if h * ch <= blk_c_cap]
    if not hbs:
        hbs = sorted(aligned)           # ch alone exceeds the cap: smallest first
    if not hbs:
        return None

    budget = int(vmem_limit * 0.7)
    tqs = _tq_candidates(t)

    # Phase 1: full-T K/V (stays VMEM-resident across the q-tile axis).
    for hb in hbs:
        for tq in tqs:
            if _vmem_usage(hb, ch, tq, t, itemsize, exp_itemsize) <= budget:
                return hb, tq, t
    # Phase 2: kv tiling (online-softmax over the kv grid axis).
    tks = [c for c in (2048, 1024, 512, 256, 128) if c < t]
    for hb in hbs:
        for tq in tqs:
            for tk in tks:
                if _vmem_usage(hb, ch, tq, tk, itemsize, exp_itemsize) <= budget:
                    return hb, tq, tk
    # Last resort: smallest everything (may spill, but still runs).
    return min(hbs), tqs[-1], (tks[-1] if tks else t)


# ---------------------------------------------------------------------------
# Wrapper
# ---------------------------------------------------------------------------
def _xla_reference(qkv, n_heads):
    """Plain-XLA path: fallback for odd head dims and numerical reference."""
    bs, width, length = qkv.shape
    ch = width // (3 * n_heads)
    scale = 1.0 / math.sqrt(math.sqrt(ch))
    q, k, v = jnp.split(qkv, 3, axis=1)
    q = q.reshape(bs * n_heads, ch, length).astype(jnp.float32)
    k = k.reshape(bs * n_heads, ch, length).astype(jnp.float32)
    v = v.reshape(bs * n_heads, ch, length).astype(jnp.float32)
    w = jnp.einsum("bct,bcs->bts", q * scale, k * scale)
    w = jax.nn.softmax(w, axis=-1)
    a = jnp.einsum("bts,bcs->bct", w, v)
    return a.reshape(bs, -1, length).astype(qkv.dtype)


def qkv_attention(qkv, n_heads, *, allow_bf16_matmul=True, tile_override=None):
    """Pallas implementation of QKVAttention.forward(qkv) (packed qkv, mask=None).

    qkv: [N, 3*H*C, T]  ->  [N, H*C, T]
    """
    bs, width, length = qkv.shape
    assert width % (3 * n_heads) == 0
    ch = width // (3 * n_heads)
    scale_sq = 1.0 / math.sqrt(ch)        # == (ch ** -0.25) ** 2

    has_bf16_eup, vmem_cap = _chip_caps()
    vmem_limit = max(int(vmem_cap * 0.7), 32 * 1024 * 1024)

    dtype = np.dtype(qkv.dtype)
    itemsize = dtype.itemsize
    if allow_bf16_matmul and dtype == np.dtype(jnp.float32):
        mxu_dtype = np.dtype(jnp.bfloat16)   # full-rate MXU; accumulation is f32
    else:
        mxu_dtype = dtype
    exp_dtype = (np.dtype(jnp.bfloat16)
                 if (has_bf16_eup and mxu_dtype == np.dtype(jnp.bfloat16))
                 else np.dtype(jnp.float32))

    if tile_override is not None:
        plan = tile_override
    else:
        plan = _plan_tiles(n_heads, ch, length, itemsize,
                           exp_dtype.itemsize, vmem_limit)
    if plan is None:
        # TODO(synk): head dims that can't be padded to the sublane tile take
        # the plain-XLA path instead of a Pallas kernel.
        return _xla_reference(qkv, n_heads)

    hb, tq, tk = plan
    blk_c = hb * ch
    assert blk_c % 8 == 0, "head-block channel rows must be sublane aligned"
    n_hblk = n_heads // hb
    n_qblk = pl.cdiv(length, tq)
    n_kblk = pl.cdiv(length, tk)
    kv_mask = (length % tk) != 0

    kernel = functools.partial(
        _qkv_attention_kernel, hb=hb, ch=ch, scale_sq=scale_sq,
        mxu_dtype=mxu_dtype, exp_dtype=exp_dtype,
        kv_mask=kv_mask, t_total=length)

    q_spec = pl.BlockSpec((1, blk_c, tq), lambda n, h, qi, ki: (n, h, qi))
    k_spec = pl.BlockSpec((1, blk_c, tk),
                          lambda n, h, qi, ki: (n, n_hblk + h, ki))
    v_spec = pl.BlockSpec((1, blk_c, tk),
                          lambda n, h, qi, ki: (n, 2 * n_hblk + h, ki))
    o_spec = pl.BlockSpec((1, blk_c, tq), lambda n, h, qi, ki: (n, h, qi))

    return pl.pallas_call(
        kernel,
        out_shape=jax.ShapeDtypeStruct((bs, n_heads * ch, length), qkv.dtype),
        grid_spec=pltpu.PrefetchScalarGridSpec(
            num_scalar_prefetch=0,
            grid=(bs, n_hblk, n_qblk, n_kblk),
            in_specs=[q_spec, k_spec, v_spec],
            out_specs=o_spec,
            scratch_shapes=[pltpu.VMEM((hb, tq, 1), jnp.float32),    # running max
                            pltpu.VMEM((hb, tq, 1), jnp.float32),    # running denom
                            pltpu.VMEM((hb, tq, ch), jnp.float32)],  # unnormalized out
        ),
        compiler_params=pltpu.CompilerParams(
            # batch / head-block / q-tile are independent -> megacore may split
            # any of them; the kv axis carries the online-softmax state.
            dimension_semantics=("parallel", "parallel", "parallel", "arbitrary"),
            vmem_limit_bytes=vmem_limit,
        ),
    )(qkv, qkv, qkv)       # one HBM buffer, three BlockSpec views


# ---------------------------------------------------------------------------
# Self-test
# ---------------------------------------------------------------------------
if __name__ == "__main__":
    key = jax.random.PRNGKey(0)

    # Shape consistent with the module: N=2, H=2, C=8, T=16 -> qkv [2, 48, 16].
    N, H, C, T = 2, 2, 8, 16
    qkv = jax.random.normal(key, (N, 3 * H * C, T), dtype=jnp.float32)
    ref = _xla_reference(qkv, n_heads=H)

    # 1) Default fast path (bf16 MXU operands; bf16 exp on v6e/v7x).
    out = jax.block_until_ready(qkv_attention(qkv, n_heads=H))
    assert out.shape == (N, H * C, T)
    assert jnp.allclose(out, ref, atol=8e-2, rtol=8e-2), \
        float(jnp.max(jnp.abs(out - ref)))

    # 2) Exact-dtype path (f32 MXU / f32 exp; only the approx reciprocal deviates).
    out32 = jax.block_until_ready(
        qkv_attention(qkv, n_heads=H, allow_bf16_matmul=False))
    assert jnp.allclose(out32, ref, atol=2e-3, rtol=2e-3), \
        float(jnp.max(jnp.abs(out32 - ref)))

    # 3) Force the kv-tiled (flash) path incl. padded q tiles and kv masking.
    key2 = jax.random.PRNGKey(1)
    N2, T2 = 1, 320
    qkv2 = jax.random.normal(key2, (N2, 3 * H * C, T2), dtype=jnp.float32)
    out2 = jax.block_until_ready(
        qkv_attention(qkv2, n_heads=H, allow_bf16_matmul=False,
                      tile_override=(2, 128, 128)))
    ref2 = _xla_reference(qkv2, n_heads=H)
    assert out2.shape == (N2, H * C, T2)
    assert jnp.allclose(out2, ref2, atol=2e-3, rtol=2e-3), \
        float(jnp.max(jnp.abs(out2 - ref2)))

    print("KERNEL_OK")
</pallas_src>

<mosaic_0001>
module attributes {stable_mosaic.version = 11 : i64} {
  func.func @_qkv_attention_kernel(%arg0: i32, %arg1: i32, %arg2: i32, %arg3: i32, %arg4: memref<1x16x16xf32, #tpu.memory_space<vmem>>, %arg5: memref<1x16x16xf32, #tpu.memory_space<vmem>>, %arg6: memref<1x16x16xf32, #tpu.memory_space<vmem>>, %arg7: memref<1x16x16xf32, #tpu.memory_space<vmem>>, %arg8: memref<2x16x1xf32, #tpu.memory_space<vmem>>, %arg9: memref<2x16x1xf32, #tpu.memory_space<vmem>>, %arg10: memref<2x16x8xf32, #tpu.memory_space<vmem>>) attributes {dimension_semantics = [#tpu.dimension_semantics<parallel>, #tpu.dimension_semantics<parallel>, #tpu.dimension_semantics<parallel>, #tpu.dimension_semantics<arbitrary>], iteration_bounds = array<i64: 2, 1, 1, 1>, scalar_prefetch = 0 : i64, scratch_operands = 3 : i64, tpu.core_type = #tpu.core_type<tc>, window_params = [{transform_indices = @transform_0, window_bounds = array<i64: 1, 16, 16>}, {transform_indices = @transform_1, window_bounds = array<i64: 1, 16, 16>}, {transform_indices = @transform_2, window_bounds = array<i64: 1, 16, 16>}, {transform_indices = @transform_3, window_bounds = array<i64: 1, 16, 16>}]} {
    %c0_i32 = arith.constant 0 : i32
    %0 = arith.cmpi eq, %arg3, %c0_i32 : i32
    %1 = arith.extui %0 : i1 to i32
    %c0_i32_0 = arith.constant 0 : i32
    %2 = arith.cmpi ne, %1, %c0_i32_0 : i32
    scf.if %2 {
      %cst_33 = arith.constant 0xFF800000 : f32
      %44 = vector.broadcast %cst_33 : f32 to vector<2x16x1xf32>
      %c0_34 = arith.constant 0 : index
      %c0_35 = arith.constant 0 : index
      %c0_36 = arith.constant 0 : index
      %45 = vector.load %arg8[%c0_34, %c0_35, %c0_36] : memref<2x16x1xf32, #tpu.memory_space<vmem>>, vector<2x16x1xf32>
      tpu.vector_store %arg8[%c0_34, %c0_35, %c0_36], %44 {strides = array<i32>} : memref<2x16x1xf32, #tpu.memory_space<vmem>>, vector<2x16x1xf32>,
      %cst_37 = arith.constant 0.000000e+00 : f32
      %46 = vector.broadcast %cst_37 : f32 to vector<2x16x1xf32>
      %c0_38 = arith.constant 0 : index
      %c0_39 = arith.constant 0 : index
      %c0_40 = arith.constant 0 : index
      %47 = vector.load %arg9[%c0_38, %c0_39, %c0_40] : memref<2x16x1xf32, #tpu.memory_space<vmem>>, vector<2x16x1xf32>
      tpu.vector_store %arg9[%c0_38, %c0_39, %c0_40], %46 {strides = array<i32>} : memref<2x16x1xf32, #tpu.memory_space<vmem>>, vector<2x16x1xf32>,
      %cst_41 = arith.constant 0.000000e+00 : f32
      %48 = vector.broadcast %cst_41 : f32 to vector<2x16x8xf32>
      %c0_42 = arith.constant 0 : index
      %c0_43 = arith.constant 0 : index
      %c0_44 = arith.constant 0 : index
      %49 = vector.load %arg10[%c0_42, %c0_43, %c0_44] : memref<2x16x8xf32, #tpu.memory_space<vmem>>, vector<2x16x8xf32>
      tpu.vector_store %arg10[%c0_42, %c0_43, %c0_44], %48 {strides = array<i32>} : memref<2x16x8xf32, #tpu.memory_space<vmem>>, vector<2x16x8xf32>,
    } else {
    }
    %c0 = arith.constant 0 : index
    %c0_1 = arith.constant 0 : index
    %c0_2 = arith.constant 0 : index
    %3 = vector.load %arg4[%c0, %c0_1, %c0_2] : memref<1x16x16xf32, #tpu.memory_space<vmem>>, vector<1x16x16xf32>
    %4 = vector.shape_cast %3 : vector<1x16x16xf32> to vector<16x16xf32>
    %5 = vector.shape_cast %4 : vector<16x16xf32> to vector<2x8x16xf32>
    %cst = arith.constant 0.353553385 : f32
    %6 = vector.broadcast %cst : f32 to vector<2x8x16xf32>
    %7 = arith.mulf %5, %6 : vector<2x8x16xf32>
    %c0_3 = arith.constant 0 : index
    %c0_4 = arith.constant 0 : index
    %c0_5 = arith.constant 0 : index
    %8 = vector.load %arg5[%c0_3, %c0_4, %c0_5] : memref<1x16x16xf32, #tpu.memory_space<vmem>>, vector<1x16x16xf32>
    %9 = vector.shape_cast %8 : vector<1x16x16xf32> to vector<16x16xf32>
    %10 = vector.shape_cast %9 : vector<16x16xf32> to vector<2x8x16xf32>
    %11 = arith.truncf %7 : vector<2x8x16xf32> to vector<2x8x16xbf16>
    %12 = arith.truncf %10 : vector<2x8x16xf32> to vector<2x8x16xbf16>
    %cst_6 = arith.constant dense<0.000000e+00> : vector<2x16x16xf32>
    %13 = tpu.matmul %11, %12, %cst_6 {dimension_numbers = #tpu.dot_dimension_numbers<[1], [1], [2], [2], [0, 0, 0, 2, 1, 2], [0], [0]>} : vector<2x8x16xbf16>, vector<2x8x16xbf16>, vector<2x16x16xf32> -> vector<2x16x16xf32>
    %c0_7 = arith.constant 0 : index
    %c0_8 = arith.constant 0 : index
    %c0_9 = arith.constant 0 : index
    %14 = vector.load %arg8[%c0_7, %c0_8, %c0_9] : memref<2x16x1xf32, #tpu.memory_space<vmem>>, vector<2x16x1xf32>
    %cst_10 = arith.constant dense<0xFF800000> : vector<2x16xf32>
    %15 = vector.multi_reduction <maximumf>, %13, %cst_10 [2] : vector<2x16x16xf32> to vector<2x16xf32>
    %16 = vector.shape_cast %15 : vector<2x16xf32> to vector<2x16x1xf32>
    %17 = arith.maximumf %14, %16 : vector<2x16x1xf32>
    %18 = arith.subf %14, %17 : vector<2x16x1xf32>
    %19 = math.exp %18 : vector<2x16x1xf32>
    %20 = vector.broadcast %17 : vector<2x16x1xf32> to vector<2x16x16xf32>
    %21 = arith.subf %13, %20 : vector<2x16x16xf32>
    %22 = math.exp %21 : vector<2x16x16xf32>
    %c0_11 = arith.constant 0 : index
    %c0_12 = arith.constant 0 : index
    %c0_13 = arith.constant 0 : index
    %23 = vector.load %arg9[%c0_11, %c0_12, %c0_13] : memref<2x16x1xf32, #tpu.memory_space<vmem>>, vector<2x16x1xf32>
    %24 = arith.mulf %19, %23 : vector<2x16x1xf32>
    %cst_14 = arith.constant dense<0.000000e+00> : vector<2x16xf32>
    %25 = vector.multi_reduction <add>, %22, %cst_14 [2] : vector<2x16x16xf32> to vector<2x16xf32>
    %26 = vector.shape_cast %25 : vector<2x16xf32> to vector<2x16x1xf32>
    %27 = arith.addf %24, %26 : vector<2x16x1xf32>
    %c0_15 = arith.constant 0 : index
    %c0_16 = arith.constant 0 : index
    %c0_17 = arith.constant 0 : index
    %28 = vector.load %arg9[%c0_15, %c0_16, %c0_17] : memref<2x16x1xf32, #tpu.memory_space<vmem>>, vector<2x16x1xf32>
    tpu.vector_store %arg9[%c0_15, %c0_16, %c0_17], %27 {strides = array<i32>} : memref<2x16x1xf32, #tpu.memory_space<vmem>>, vector<2x16x1xf32>,
    %c0_18 = arith.constant 0 : index
    %c0_19 = arith.constant 0 : index
    %c0_20 = arith.constant 0 : index
    %29 = vector.load %arg8[%c0_18, %c0_19, %c0_20] : memref<2x16x1xf32, #tpu.memory_space<vmem>>, vector<2x16x1xf32>
    tpu.vector_store %arg8[%c0_18, %c0_19, %c0_20], %17 {strides = array<i32>} : memref<2x16x1xf32, #tpu.memory_space<vmem>>, vector<2x16x1xf32>,
    %c0_21 = arith.constant 0 : index
    %c0_22 = arith.constant 0 : index
    %c0_23 = arith.constant 0 : index
    %30 = vector.load %arg6[%c0_21, %c0_22, %c0_23] : memref<1x16x16xf32, #tpu.memory_space<vmem>>, vector<1x16x16xf32>
    %31 = vector.shape_cast %30 : vector<1x16x16xf32> to vector<16x16xf32>
    %32 = vector.shape_cast %31 : vector<16x16xf32> to vector<2x8x16xf32>
    %33 = arith.truncf %32 : vector<2x8x16xf32> to vector<2x8x16xbf16>
    %34 = arith.truncf %22 : vector<2x16x16xf32> to vector<2x16x16xbf16>
    %cst_24 = arith.constant dense<0.000000e+00> : vector<2x16x8xf32>
    %35 = tpu.matmul %34, %33, %cst_24 {dimension_numbers = #tpu.dot_dimension_numbers<[2], [2], [1], [1], [0, 0, 0, 1, 1, 1], [0], [0]>} : vector<2x16x16xbf16>, vector<2x8x16xbf16>, vector<2x16x8xf32> -> vector<2x16x8xf32>
    %c0_25 = arith.constant 0 : index
    %c0_26 = arith.constant 0 : index
    %c0_27 = arith.constant 0 : index
    %36 = vector.load %arg10[%c0_25, %c0_26, %c0_27] : memref<2x16x8xf32, #tpu.memory_space<vmem>>, vector<2x16x8xf32>
    %37 = vector.broadcast %19 : vector<2x16x1xf32> to vector<2x16x8xf32>
    %38 = arith.mulf %37, %36 : vector<2x16x8xf32>
    %39 = arith.addf %38, %35 : vector<2x16x8xf32>
    %c0_28 = arith.constant 0 : index
    %c0_29 = arith.constant 0 : index
    %c0_30 = arith.constant 0 : index
    %40 = vector.load %arg10[%c0_28, %c0_29, %c0_30] : memref<2x16x8xf32, #tpu.memory_space<vmem>>, vector<2x16x8xf32>
    tpu.vector_store %arg10[%c0_28, %c0_29, %c0_30], %39 {strides = array<i32>} : memref<2x16x8xf32, #tpu.memory_space<vmem>>, vector<2x16x8xf32>,
    %c0_i32_31 = arith.constant 0 : i32
    %41 = arith.cmpi eq, %arg3, %c0_i32_31 : i32
    %42 = arith.extui %41 : i1 to i32
    %c0_i32_32 = arith.constant 0 : i32
    %43 = arith.cmpi ne, %42, %c0_i32_32 : i32
    scf.if %43 {
      %c0_33 = arith.constant 0 : index
      %c0_34 = arith.constant 0 : index
      %c0_35 = arith.constant 0 : index
      %44 = vector.load %arg9[%c0_33, %c0_34, %c0_35] : memref<2x16x1xf32, #tpu.memory_space<vmem>>, vector<2x16x1xf32>
      %45 = tpu.reciprocal %44 {approx = true} : vector<2x16x1xf32> -> vector<2x16x1xf32>
      %c0_36 = arith.constant 0 : index
      %c0_37 = arith.constant 0 : index
      %c0_38 = arith.constant 0 : index
      %46 = vector.load %arg10[%c0_36, %c0_37, %c0_38] : memref<2x16x8xf32, #tpu.memory_space<vmem>>, vector<2x16x8xf32>
      %47 = vector.broadcast %45 : vector<2x16x1xf32> to vector<2x16x8xf32>
      %48 = arith.mulf %46, %47 : vector<2x16x8xf32>
      %49 = tpu.transpose %48, [0, 2, 1] : vector<2x16x8xf32> -> vector<2x8x16xf32>
      %50 = vector.shape_cast %49 : vector<2x8x16xf32> to vector<16x16xf32>
      %c0_39 = arith.constant 0 : index
      %c0_40 = arith.constant 0 : index
      %c0_41 = arith.constant 0 : index
      %51 = vector.load %arg7[%c0_39, %c0_40, %c0_41] : memref<1x16x16xf32, #tpu.memory_space<vmem>>, vector<1x16x16xf32>
      %52 = vector.shape_cast %51 : vector<1x16x16xf32> to vector<16x16xf32>
      %53 = vector.shape_cast %50 : vector<16x16xf32> to vector<1x16x16xf32>
      tpu.vector_store %arg7[%c0_39, %c0_40, %c0_41], %53 {strides = array<i32>} : memref<1x16x16xf32, #tpu.memory_space<vmem>>, vector<1x16x16xf32>,
    } else {
    }
    return
  }
  func.func @transform_0(%arg0: i32, %arg1: i32, %arg2: i32, %arg3: i32) -> (i32, i32, i32) {
    %c0_i32 = arith.constant 0 : i32
    return %arg0, %arg1, %arg2 : i32, i32, i32
  }
  func.func @transform_1(%arg0: i32, %arg1: i32, %arg2: i32, %arg3: i32) -> (i32, i32, i32) {
    %c1_i32 = arith.constant 1 : i32
    %0 = arith.addi %c1_i32, %arg1 : i32
    %c0_i32 = arith.constant 0 : i32
    return %arg0, %0, %arg3 : i32, i32, i32
  }
  func.func @transform_2(%arg0: i32, %arg1: i32, %arg2: i32, %arg3: i32) -> (i32, i32, i32) {
    %c2_i32 = arith.constant 2 : i32
    %0 = arith.addi %c2_i32, %arg1 : i32
    %c0_i32 = arith.constant 0 : i32
    return %arg0, %0, %arg3 : i32, i32, i32
  }
  func.func @transform_3(%arg0: i32, %arg1: i32, %arg2: i32, %arg3: i32) -> (i32, i32, i32) {
    %c0_i32 = arith.constant 0 : i32
    return %arg0, %arg1, %arg2 : i32, i32, i32
  }
}

</mosaic_0001>

<llo_original>
// kernel: tpu_custom_call.1
$region0: #{tpu_custom_call.1}
  #allocation0 [shape = 'u32[]', space=smem, size = 0x4, offset = 0x4, fixed_abs, tag = 'smem constant byte address 0x4 - core index']
  #allocation1 [shape = 'u32[144,128]{1,0:T(1,128)}', space=vmem, size = 0x12000, scoped, tag = 'internal scratch']
  #allocation2 [shape = 'f32[2,16,1]{2,1,0:T(8,128)}', space=vmem, size = 0x4000, scoped, tag = 'scratch operand']
  #allocation3 [shape = 'f32[2,16,1]{2,1,0:T(8,128)}', space=vmem, size = 0x4000, scoped, tag = 'scratch operand']
  #allocation4 [shape = 'f32[2,16,8]{2,1,0:T(8,128)}', space=vmem, size = 0x4000, scoped, tag = 'scratch operand']
  %s0 = inlined_call_operand.vmem [shape: f32[2,48,16], index: 0, kind: input, shape index: {}]
  %s1 = inlined_call_operand.vmem [shape: f32[2,48,16], index: 1, kind: input, shape index: {}]
  %s2 = inlined_call_operand.vmem [shape: f32[2,48,16], index: 2, kind: input, shape index: {}]
  %s3 = inlined_call_operand.hbm [shape: f32[2,16,16], index: 3, kind: output, shape index: {}]
  %s4 = sld [smem:[#allocation0]]
  $region53: #{tpu_custom_call.1} parent=0
    _
  %s6 = ssub.s32 1, %s4
  %s7 = scalar_select 0, %s6, %s4
  $region1: #{tpu_custom_call.1} parent=0
    #allocation5 [shape = 'u8[16384]{0}', space=vmem, size = 0x4000, scoped, tag = 'output window, operand 0']
    #allocation6 [shape = 's32[2]{0}', space=sflag, size = 0x8, scoped, tag = 'scoped memory for tpu_custom_call.1']
    %8 = vsyncpa [#allocation6], 0
    %s9 = scalar_lea.sflag [#allocation6], 1
    %10 = vsyncpa %s9, 0
    loop: start=0, step=1, limit=4
    $region2: #{tpu_custom_call.1} parent=1 // loop_pre_header
      _
    $region3: #{tpu_custom_call.1} parent=1 // loop_header
      %s12 = sphi 0, %s16
      %p13 = scmp.ge.s32.totalorder %s12, 4
      %s19 = sphi 0, %s45
      %s20 = sphi 0, %s41
      %s21 = sphi 0, %s37
      %s22 = sphi 0, %s33
      %s23 = sphi 0, %s19
      %s24 = sphi 0, %s20
      %s25 = sphi 0, %s21
      %s26 = sphi 0, %s22
      %s27 = sphi 0, %s23
      %s28 = sphi 0, %s24
      %s29 = sphi 0, %s25
      %s30 = sphi 0, %s26
      %s52 = sphi 0, %s54
      %s55 = sphi 0, %s52
      %s56 = sphi 0, %s55
      %s72 = sphi 0, %s56
      %s84 = sphi 0, %s86
      %s87 = sphi 0, %s84
      %s88 = sphi 0, %s87
      %s104 = sphi 0, %s88
      %s116 = sphi 0, %s118
      %s119 = sphi 0, %s116
      %s120 = sphi 0, %s119
      %s136 = sphi 0, %s120
      %s146 = sphi 0, %s148
      %s149 = sphi 0, %s146
      %s150 = sphi 0, %s149
      %s166 = sphi 0, %s150
    $region4: #{tpu_custom_call.1} parent=1 // loop_header_branch
      %15 = sbr.rel (%p13) target = $region8
    $region5: #{tpu_custom_call.1} parent=1 // loop_body
      %s17 = ssub.s32 %s12, 1
      %s18 = ssub.s32 %s12, 2
      %s31 = sadd.s32 1, %s22
      %p32 = scmp.ge.s32.totalorder %s31, 1
      %s33 = scalar_select %p32, 0, %s31
      %s34 = sadd.s32 1, %s21
      %s35 = scalar_select %p32, %s34, %s21
      %p36 = scmp.ge.s32.totalorder %s35, 1
      %s37 = scalar_select %p36, 0, %s35
      %s38 = sadd.s32 1, %s20
      %s39 = scalar_select %p36, %s38, %s20
      %p40 = scmp.ge.s32.totalorder %s39, 1
      %s41 = scalar_select %p40, 0, %s39
      %s42 = sadd.s32 1, %s19
      %s43 = scalar_select %p40, %s42, %s19
      %p44 = scmp.ge.s32.totalorder %s43, 2
      %s45 = scalar_select %p44, 0, %s43
      %s46 = ssub.s32 %s19, %s45
      %s47 = ssub.s32 %s20, %s41
      %s48 = sor.u32 %s46, %s47
      %s49 = ssub.s32 %s21, %s37
      %s50 = sor.u32 %s48, %s49
      %p51 = scmp.eq.s32.totalorder %s50, 0
      %s53 = sadd.s32 %s52, 1
      %s54 = scalar_select %p51, %s52, %s53
      %p57 = pneg %p51
      %p58 = scmp.eq.s32.totalorder %s12, 1
      %p59 = por %p57, %p58
      %p60 = scmp.ne.s32.totalorder %s52, %s55
      %p61 = scmp.eq.s32.totalorder %s12, 0
      %p62 = por %p60, %p61
      %p63 = scmp.ne.s32.totalorder %s52, %s55
      %p64 = scmp.eq.s32.totalorder %s17, 1
      %p65 = por %p63, %p64
      %p66 = scmp.ne.s32.totalorder %s55, %s56
      %p67 = scmp.eq.s32.totalorder %s17, 0
      %p68 = por %p66, %p67
      %p69 = scmp.ne.s32.totalorder %s55, %s56
      %p70 = scmp.eq.s32.totalorder %s18, 1
      %p71 = por %p69, %p70
      %p73 = scmp.ne.s32.totalorder %s56, %s72
      %p74 = scmp.eq.s32.totalorder %s18, 0
      %p75 = por %p73, %p74
      %s76 = sadd.s32 %s20, 1
      %s77 = sadd.s32 %s41, 1
      %s78 = ssub.s32 %s19, %s45
      %s79 = ssub.s32 %s76, %s77
      %s80 = sor.u32 %s78, %s79
      %s81 = ssub.s32 %s22, %s33
      %s82 = sor.u32 %s80, %s81
      %p83 = scmp.eq.s32.totalorder %s82, 0
      %s85 = sadd.s32 %s84, 1
      %s86 = scalar_select %p83, %s84, %s85
      %p89 = pneg %p83
      %p90 = scmp.eq.s32.totalorder %s12, 1
      %p91 = por %p89, %p90
      %p92 = scmp.ne.s32.totalorder %s84, %s87
      %p93 = scmp.eq.s32.totalorder %s12, 0
      %p94 = por %p92, %p93
      %p95 = scmp.ne.s32.totalorder %s84, %s87
      %p96 = scmp.eq.s32.totalorder %s17, 1
      %p97 = por %p95, %p96
      %p98 = scmp.ne.s32.totalorder %s87, %s88
      %p99 = scmp.eq.s32.totalorder %s17, 0
      %p100 = por %p98, %p99
      %p101 = scmp.ne.s32.totalorder %s87, %s88
      %p102 = scmp.eq.s32.totalorder %s18, 1
      %p103 = por %p101, %p102
      %p105 = scmp.ne.s32.totalorder %s88, %s104
      %p106 = scmp.eq.s32.totalorder %s18, 0
      %p107 = por %p105, %p106
      %s108 = sadd.s32 %s20, 2
      %s109 = sadd.s32 %s41, 2
      %s110 = ssub.s32 %s19, %s45
      %s111 = ssub.s32 %s108, %s109
      %s112 = sor.u32 %s110, %s111
      %s113 = ssub.s32 %s22, %s33
      %s114 = sor.u32 %s112, %s113
      %p115 = scmp.eq.s32.totalorder %s114, 0
      %s117 = sadd.s32 %s116, 1
      %s118 = scalar_select %p115, %s116, %s117
      %p121 = pneg %p115
      %p122 = scmp.eq.s32.totalorder %s12, 1
      %p123 = por %p121, %p122
      %p124 = scmp.ne.s32.totalorder %s116, %s119
      %p125 = scmp.eq.s32.totalorder %s12, 0
      %p126 = por %p124, %p125
      %p127 = scmp.ne.s32.totalorder %s116, %s119
      %p128 = scmp.eq.s32.totalorder %s17, 1
      %p129 = por %p127, %p128
      %p130 = scmp.ne.s32.totalorder %s119, %s120
      %p131 = scmp.eq.s32.totalorder %s17, 0
      %p132 = por %p130, %p131
      %p133 = scmp.ne.s32.totalorder %s119, %s120
      %p134 = scmp.eq.s32.totalorder %s18, 1
      %p135 = por %p133, %p134
      %p137 = scmp.ne.s32.totalorder %s120, %s136
      %p138 = scmp.eq.s32.totalorder %s18, 0
      %p139 = por %p137, %p138
      %s140 = ssub.s32 %s19, %s45
      %s141 = ssub.s32 %s20, %s41
      %s142 = sor.u32 %s140, %s141
      %s143 = ssub.s32 %s21, %s37
      %s144 = sor.u32 %s142, %s143
      %p145 = scmp.eq.s32.totalorder %s144, 0
      %s147 = sadd.s32 %s146, 1
      %s148 = scalar_select %p145, %s146, %s147
      %p151 = pneg %p145
      %p152 = scmp.eq.s32.totalorder %s12, 1
      %p153 = por %p151, %p152
      %p154 = scmp.ne.s32.totalorder %s146, %s149
      %p155 = scmp.eq.s32.totalorder %s12, 0
      %p156 = por %p154, %p155
      %p157 = scmp.ne.s32.totalorder %s146, %s149
      %p158 = scmp.eq.s32.totalorder %s17, 1
      %p159 = por %p157, %p158
      %p160 = scmp.ne.s32.totalorder %s149, %s150
      %p161 = scmp.eq.s32.totalorder %s17, 0
      %p162 = por %p160, %p161
      %p163 = scmp.ne.s32.totalorder %s149, %s150
      %p164 = scmp.eq.s32.totalorder %s18, 1
      %p165 = por %p163, %p164
      %p167 = scmp.ne.s32.totalorder %s150, %s166
      %p168 = scmp.eq.s32.totalorder %s18, 0
      %p169 = por %p167, %p168
      %p170 = scmp.le.s32.totalorder 1, %s12
      %p171 = scmp.lt.s32.totalorder %s12, 3
      %p172 = pnand %p170, %p171
      %p173 = pneg %p172
      // Predicated region
      $region9: #{tpu_custom_call.1} parent=5 // pred_check
        _
      $region10: #{tpu_custom_call.1} parent=5 // pred_check_branch
        %175 = sbr.rel (%p172) target = $region12
      $region11: #{tpu_custom_call.1} parent=5 // pred_region
        %s176 = ssub.s32 %s12, 1
      $region12: #{tpu_custom_call.1} parent=5 // pred_fallthru
        _
      %p177 = scmp.lt.s32.totalorder %s12, 2
      // Predicated region
      $region13: #{tpu_custom_call.1} parent=5 // pred_check
        %p178 = pneg %p177
      $region14: #{tpu_custom_call.1} parent=5 // pred_check_branch
        %180 = sbr.rel (%p178) target = $region16
      $region15: #{tpu_custom_call.1} parent=5 // pred_region
        // Predicated region
        $region17: #{tpu_custom_call.1} parent=15 // pred_check
          %p181 = pneg %p62
        $region18: #{tpu_custom_call.1} parent=15 // pred_check_branch
          %183 = sbr.rel (%p181) target = $region20
        $region19: #{tpu_custom_call.1} parent=15 // pred_region
          %s184 = smul.u32 2, %s20
          %p185 = scmp.lt.s32.totalorder %s19, 1
          %s186 = scalar_select %p185, %s19, 1
          %p187 = scmp.lt.s32.totalorder %s184, 5
          %s188 = scalar_select %p187, %s184, 5
          %p189 = scmp.lt.s32.totalorder %s21, 0
          %s190 = scalar_select %p189, %s21, 0
          %s191 = sadd.s32 %s190, %s188
          %s192 = smul.addr %s186, 6
          %s193 = sadd.s32 %s191, %s192
          %s194 = smul.addr %s193, 8
          %s195 = scalar_lea.vmem %s0, %s194
          %s196 = smul.u32 2, %s20
        $region20: #{tpu_custom_call.1} parent=15 // pred_fallthru
          _
        // Predicated region
        $region21: #{tpu_custom_call.1} parent=15 // pred_check
          %p197 = pneg %p94
        $region22: #{tpu_custom_call.1} parent=15 // pred_check_branch
          %199 = sbr.rel (%p197) target = $region24
        $region23: #{tpu_custom_call.1} parent=15 // pred_region
          %s200 = sadd.s32 %s20, 1
          %s201 = smul.u32 2, %s200
          %p202 = scmp.lt.s32.totalorder %s19, 1
          %s203 = scalar_select %p202, %s19, 1
          %p204 = scmp.lt.s32.totalorder %s201, 5
          %s205 = scalar_select %p204, %s201, 5
          %p206 = scmp.lt.s32.totalorder %s22, 0
          %s207 = scalar_select %p206, %s22, 0
          %s208 = sadd.s32 %s207, %s205
          %s209 = smul.addr %s203, 6
          %s210 = sadd.s32 %s208, %s209
          %s211 = smul.addr %s210, 8
          %s212 = scalar_lea.vmem %s1, %s211
          %s213 = sadd.s32 %s20, 1
          %s214 = smul.u32 2, %s213
        $region24: #{tpu_custom_call.1} parent=15 // pred_fallthru
          _
        // Predicated region
        $region25: #{tpu_custom_call.1} parent=15 // pred_check
          %p215 = pneg %p126
        $region26: #{tpu_custom_call.1} parent=15 // pred_check_branch
          %217 = sbr.rel (%p215) target = $region28
        $region27: #{tpu_custom_call.1} parent=15 // pred_region
          %s218 = sadd.s32 %s20, 2
          %s219 = smul.u32 2, %s218
          %p220 = scmp.lt.s32.totalorder %s19, 1
          %s221 = scalar_select %p220, %s19, 1
          %p222 = scmp.lt.s32.totalorder %s219, 5
          %s223 = scalar_select %p222, %s219, 5
          %p224 = scmp.lt.s32.totalorder %s22, 0
          %s225 = scalar_select %p224, %s22, 0
          %s226 = sadd.s32 %s225, %s223
          %s227 = smul.addr %s221, 6
          %s228 = sadd.s32 %s226, %s227
          %s229 = smul.addr %s228, 8
          %s230 = scalar_lea.vmem %s2, %s229
          %s231 = sadd.s32 %s20, 2
          %s232 = smul.u32 2, %s231
        $region28: #{tpu_custom_call.1} parent=15 // pred_fallthru
          _
      $region16: #{tpu_custom_call.1} parent=5 // pred_fallthru
        _
      %p233 = scmp.le.s32.totalorder 1, %s12
      %p234 = scmp.lt.s32.totalorder %s12, 3
      %p235 = pnand %p233, %p234
      %p236 = pneg %p235
      // Predicated region
      $region29: #{tpu_custom_call.1} parent=5 // pred_check
        _
      $region30: #{tpu_custom_call.1} parent=5 // pred_check_branch
        %238 = sbr.rel (%p235) target = $region32
      $region31: #{tpu_custom_call.1} parent=5 // pred_region
        %s239 = ssub.s32 %s12, 1
        %s240 = smul.u32 2, %s24
        %p241 = scmp.lt.s32.totalorder %s23, 1
        %s242 = scalar_select %p241, %s23, 1
        %p243 = scmp.lt.s32.totalorder %s240, 5
        %s244 = scalar_select %p243, %s240, 5
        %p245 = scmp.lt.s32.totalorder %s25, 0
        %s246 = scalar_select %p245, %s25, 0
        %s247 = sadd.s32 %s246, %s244
        %s248 = smul.addr %s242, 6
        %s249 = sadd.s32 %s247, %s248
        %s250 = smul.addr %s249, 8
        %s251 = scalar_lea.vmem %s0, %s250
        %p252 = pneg %p68
        %p253 = pneg %p65
        %s254 = sadd.s32 %s24, 1
        %s255 = smul.u32 2, %s254
        %p256 = scmp.lt.s32.totalorder %s23, 1
        %s257 = scalar_select %p256, %s23, 1
        %p258 = scmp.lt.s32.totalorder %s255, 5
        %s259 = scalar_select %p258, %s255, 5
        %p260 = scmp.lt.s32.totalorder %s26, 0
        %s261 = scalar_select %p260, %s26, 0
        %s262 = sadd.s32 %s261, %s259
        %s263 = smul.addr %s257, 6
        %s264 = sadd.s32 %s262, %s263
        %s265 = smul.addr %s264, 8
        %s266 = scalar_lea.vmem %s1, %s265
        %p267 = pneg %p100
        %p268 = pneg %p97
        %s269 = sadd.s32 %s24, 2
        %s270 = smul.u32 2, %s269
        %p271 = scmp.lt.s32.totalorder %s23, 1
        %s272 = scalar_select %p271, %s23, 1
        %p273 = scmp.lt.s32.totalorder %s270, 5
        %s274 = scalar_select %p273, %s270, 5
        %p275 = scmp.lt.s32.totalorder %s26, 0
        %s276 = scalar_select %p275, %s26, 0
        %s277 = sadd.s32 %s276, %s274
        %s278 = smul.addr %s272, 6
        %s279 = sadd.s32 %s277, %s278
        %s280 = smul.addr %s279, 8
        %s281 = scalar_lea.vmem %s2, %s280
        %p282 = pneg %p132
        %p283 = pneg %p129
        %p284 = pneg %p162
        %p285 = pneg %p159
        %s286 = sand.u32 %s149, 1
        %s287 = scalar_lea.sflag [#allocation6], %s286
        %s288 = sand.u32 %s149, 1
        %s289 = smul.addr %s288, 16
        %s290 = scalar_lea.vmem [#allocation5], %s289
        %s291 = smul.u32 2, %s24
        %p292 = scmp.lt.s32.totalorder %s23, 1
        %s293 = scalar_select %p292, %s23, 1
        %p294 = scmp.lt.s32.totalorder %s291, 5
        %s295 = scalar_select %p294, %s291, 5
        %p296 = scmp.lt.s32.totalorder %s25, 0
        %s297 = scalar_select %p296, %s25, 0
        %s298 = sadd.s32 %s297, %s295
        %s299 = smul.addr %s293, 6
        %s300 = sadd.s32 %s298, %s299
        %s301 = smul.addr %s300, 8
        %s302 = scalar_lea.vmem %s0, %s301
        %s303 = smul.u32 2, %s24
        %s304 = sadd.s32 %s24, 1
        %s305 = smul.u32 2, %s304
        %p306 = scmp.lt.s32.totalorder %s23, 1
        %s307 = scalar_select %p306, %s23, 1
        %p308 = scmp.lt.s32.totalorder %s305, 5
        %s309 = scalar_select %p308, %s305, 5
        %p310 = scmp.lt.s32.totalorder %s26, 0
        %s311 = scalar_select %p310, %s26, 0
        %s312 = sadd.s32 %s311, %s309
        %s313 = smul.addr %s307, 6
        %s314 = sadd.s32 %s312, %s313
        %s315 = smul.addr %s314, 8
        %s316 = scalar_lea.vmem %s1, %s315
        %s317 = sadd.s32 %s24, 1
        %s318 = smul.u32 2, %s317
        %s319 = sadd.s32 %s24, 2
        %s320 = smul.u32 2, %s319
        %p321 = scmp.lt.s32.totalorder %s23, 1
        %s322 = scalar_select %p321, %s23, 1
        %p323 = scmp.lt.s32.totalorder %s320, 5
        %s324 = scalar_select %p323, %s320, 5
        %p325 = scmp.lt.s32.totalorder %s26, 0
        %s326 = scalar_select %p325, %s26, 0
        %s327 = sadd.s32 %s326, %s324
        %s328 = smul.addr %s322, 6
        %s329 = sadd.s32 %s327, %s328
        %s330 = smul.addr %s329, 8
        %s331 = scalar_lea.vmem %s2, %s330
        %s332 = sadd.s32 %s24, 2
        %s333 = smul.u32 2, %s332
        %s334 = smul.u32 2, %s24
        %p336 = scmp.eq.s32.totalorder %s26, 0
        // Predicated region
        $region33: #{tpu_custom_call.1} parent=31 // pred_check
          %p337 = pneg %p336
        $region34: #{tpu_custom_call.1} parent=31 // pred_check_branch
          %339 = sbr.rel (%p337) target = $region36
        $region35: #{tpu_custom_call.1} parent=31 // pred_region
          %vm340 = vcmask 7168
          %341 = vst.msk [vmem:[#allocation2] sm:$0xff] %vm340, -inf
          %342 = vst.msk [vmem:[#allocation2 + $0x8] sm:$0xff] %vm340, -inf
          %343 = vst.msk [vmem:[#allocation2 + $0x10] sm:$0xff] %vm340, -inf
          %344 = vst.msk [vmem:[#allocation2 + $0x18] sm:$0xff] %vm340, -inf
          %345 = vst.msk [vmem:[#allocation3] sm:$0xff] %vm340, 0.0
          %346 = vst.msk [vmem:[#allocation3 + $0x8] sm:$0xff] %vm340, 0.0
          %347 = vst.msk [vmem:[#allocation3 + $0x10] sm:$0xff] %vm340, 0.0
          %348 = vst.msk [vmem:[#allocation3 + $0x18] sm:$0xff] %vm340, 0.0
          %vm349 = vcmask 64512
          %350 = vst.msk [vmem:[#allocation4] sm:$0xff] %vm349, 0.0
          %351 = vst.msk [vmem:[#allocation4 + $0x8] sm:$0xff] %vm349, 0.0
          %352 = vst.msk [vmem:[#allocation4 + $0x10] sm:$0xff] %vm349, 0.0
          %353 = vst.msk [vmem:[#allocation4 + $0x18] sm:$0xff] %vm349, 0.0
        $region36: #{tpu_custom_call.1} parent=31 // pred_fallthru
          _
        %v354 = vld [vmem:[%s302] sm:$0xff]
        %v355 = vld [vmem:[%s302 + $0x8] sm:$0xff]
        %v356 = vmul.f32 %v354, 0.35355338
        %v357 = vmul.f32 %v355, 0.35355338
        %v358 = vld [vmem:[%s316] sm:$0xff]
        %v359 = vld [vmem:[%s316 + $0x8] sm:$0xff]
        %v360 = vpack.c.bf16 %v356, %v356
        %v361 = vpack.c.bf16 %v357, %v357
        %v362 = vpack.c.bf16 %v358, %v358
        %v363 = vpack.c.bf16 %v359, %v359
        %364 = vxpose.xlu0.c.b16.start [1/8] %v360, 128
        %365 = vxpose.xlu0.c.b16.cont [2/8] 0, 128
        %366 = vxpose.xlu0.c.b16.cont [3/8] 0, 128
        %367 = vxpose.xlu0.c.b16.cont [4/8] 0, 128
        %368 = vxpose.xlu0.c.b16.cont [5/8] 0, 128
        %369 = vxpose.xlu0.c.b16.cont [6/8] 0, 128
        %370 = vxpose.xlu0.c.b16.cont [7/8] 0, 128
        %371 = vxpose.xlu0.c.b16.end [8/8] 0, 128
        %v372 = vpop.trf.xlu0
        %v373 = vpop.trf.xlu0
        %v374 = vpop.trf.xlu0
        %v375 = vpop.trf.xlu0
        %v376 = vpop.trf.xlu0
        %v377 = vpop.trf.xlu0
        %v378 = vpop.trf.xlu0
        %v379 = vpop.trf.xlu0
        %vm380 = vcmask 64512
        %v382 = vsel %vm380, %v372, 0
        %vm384 = vcmask 1043456
        %v386 = vsel %vm384, %v362, 0
        %388 = vmatprep.subr.bf16.mxu0 0
        %389 = vmatpush1.bf16.msra.mxu0 %v386
        %390 = vmatprep.subr.bf16.mxu0 0
        %391 = vmatpush1.bf16.msra.mxu0 0
        %392 = vmatprep.subr.bf16.mxu0 0
        %393 = vmatpush1.bf16.msra.mxu0 0
        %394 = vmatprep.subr.bf16.mxu0 0
        %395 = vmatpush1.bf16.msra.mxu0 0
        %396 = vmatprep.subr.bf16.mxu0 0
        %397 = vmatpush1.bf16.msra.mxu0 0
        %398 = vmatprep.subr.bf16.mxu0 0
        %399 = vmatpush1.bf16.msra.mxu0 0
        %400 = vmatprep.subr.bf16.mxu0 0
        %401 = vmatpush1.bf16.msra.mxu0 0
        %402 = vmatprep.subr.bf16.mxu0 0
        %403 = vmatpush1.bf16.msra.mxu0 0
        %404 = vmatprep.subr.bf16.mxu0 0
        %405 = vmatpush1.bf16.msra.mxu0 0
        %406 = vmatprep.subr.bf16.mxu0 0
        %407 = vmatpush1.bf16.msra.mxu0 0
        %408 = vmatprep.subr.bf16.mxu0 0
        %409 = vmatpush1.bf16.msra.mxu0 0
        %410 = vmatprep.subr.bf16.mxu0 0
        %411 = vmatpush1.bf16.msra.mxu0 0
        %412 = vmatprep.subr.bf16.mxu0 0
        %413 = vmatpush1.bf16.msra.mxu0 0
        %414 = vmatprep.subr.bf16.mxu0 0
        %415 = vmatpush1.bf16.msra.mxu0 0
        %416 = vmatprep.subr.bf16.mxu0 0
        %417 = vmatpush1.bf16.msra.mxu0 0
        %418 = vmatprep.subr.bf16.mxu0 0
        %419 = vmatpush1.bf16.msra.mxu0 0
        %420 = vmatprep.mubr.bf16.mxu0 0
        %421 = vmatmul.mubr.bf16.gmra.mrb[0].mxu0 %v382
        %v422 = vpop.f32.mrb[0].mxu0
        %v423 = vadd.f32 0.0, %v422
        %v424 = vpop.f32.mrb[0].mxu0
        %v425 = vpop.f32.mrb[0].mxu0
        %v426 = vadd.f32 0.0, %v425
        %v427 = vpop.f32.mrb[0].mxu0
        %428 = vdwg.mxu0
        %429 = vxpose.xlu0.c.b16.start [1/8] %v361, 128
        %430 = vxpose.xlu0.c.b16.cont [2/8] 0, 128
        %431 = vxpose.xlu0.c.b16.cont [3/8] 0, 128
        %432 = vxpose.xlu0.c.b16.cont [4/8] 0, 128
        %433 = vxpose.xlu0.c.b16.cont [5/8] 0, 128
        %434 = vxpose.xlu0.c.b16.cont [6/8] 0, 128
        %435 = vxpose.xlu0.c.b16.cont [7/8] 0, 128
        %436 = vxpose.xlu0.c.b16.end [8/8] 0, 128
        %v437 = vpop.trf.xlu0
        %v438 = vpop.trf.xlu0
        %v439 = vpop.trf.xlu0
        %v440 = vpop.trf.xlu0
        %v441 = vpop.trf.xlu0
        %v442 = vpop.trf.xlu0
        %v443 = vpop.trf.xlu0
        %v444 = vpop.trf.xlu0
        %v446 = vsel %vm380, %v437, 0
        %v449 = vsel %vm384, %v363, 0
        %451 = vmatprep.subr.bf16.mxu0 0
        %452 = vmatpush1.bf16.msra.mxu0 %v449
        %453 = vmatprep.subr.bf16.mxu0 0
        %454 = vmatpush1.bf16.msra.mxu0 0
        %455 = vmatprep.subr.bf16.mxu0 0
        %456 = vmatpush1.bf16.msra.mxu0 0
        %457 = vmatprep.subr.bf16.mxu0 0
        %458 = vmatpush1.bf16.msra.mxu0 0
        %459 = vmatprep.subr.bf16.mxu0 0
        %460 = vmatpush1.bf16.msra.mxu0 0
        %461 = vmatprep.subr.bf16.mxu0 0
        %462 = vmatpush1.bf16.msra.mxu0 0
        %463 = vmatprep.subr.bf16.mxu0 0
        %464 = vmatpush1.bf16.msra.mxu0 0
        %465 = vmatprep.subr.bf16.mxu0 0
        %466 = vmatpush1.bf16.msra.mxu0 0
        %467 = vmatprep.subr.bf16.mxu0 0
        %468 = vmatpush1.bf16.msra.mxu0 0
        %469 = vmatprep.subr.bf16.mxu0 0
        %470 = vmatpush1.bf16.msra.mxu0 0
        %471 = vmatprep.subr.bf16.mxu0 0
        %472 = vmatpush1.bf16.msra.mxu0 0
        %473 = vmatprep.subr.bf16.mxu0 0
        %474 = vmatpush1.bf16.msra.mxu0 0
        %475 = vmatprep.subr.bf16.mxu0 0
        %476 = vmatpush1.bf16.msra.mxu0 0
        %477 = vmatprep.subr.bf16.mxu0 0
        %478 = vmatpush1.bf16.msra.mxu0 0
        %479 = vmatprep.subr.bf16.mxu0 0
        %480 = vmatpush1.bf16.msra.mxu0 0
        %481 = vmatprep.subr.bf16.mxu0 0
        %482 = vmatpush1.bf16.msra.mxu0 0
        %483 = vmatprep.mubr.bf16.mxu0 0
        %484 = vmatmul.mubr.bf16.gmra.mrb[0].mxu0 %v446
        %v485 = vpop.f32.mrb[0].mxu0
        %v486 = vadd.f32 0.0, %v485
        %v487 = vpop.f32.mrb[0].mxu0
        %v488 = vpop.f32.mrb[0].mxu0
        %v489 = vadd.f32 0.0, %v488
        %v490 = vpop.f32.mrb[0].mxu0
        %491 = vdwg.mxu0
        %v492 = vld [vmem:[#allocation2] sm:$0xff]
        %v493 = vld [vmem:[#allocation2 + $0x8] sm:$0xff]
        %v494 = vld [vmem:[#allocation2 + $0x10] sm:$0xff]
        %v495 = vld [vmem:[#allocation2 + $0x18] sm:$0xff]
        %vm496 = vcmask 130048
        %v497 = vsel %vm496, %v423, -inf
        %498 = vmax.xlane.f32.xlu0 %v497
        %v499 = vpop.xlane.xlu0 %498
        %v500 = vsel %vm496, %v426, -inf
        %501 = vmax.xlane.f32.xlu0 %v500
        %v502 = vpop.xlane.xlu0 %501
        %v503 = vsel %vm496, %v486, -inf
        %504 = vmax.xlane.f32.xlu0 %v503
        %v505 = vpop.xlane.xlu0 %504
        %v506 = vsel %vm496, %v489, -inf
        %507 = vmax.xlane.f32.xlu0 %v506
        %v508 = vpop.xlane.xlu0 %507
        %v509 = vmax.f32 %v492, %v499
        %v510 = vmax.f32 %v493, %v502
        %v511 = vmax.f32 %v494, %v505
        %v512 = vmax.f32 %v495, %v508
        %v513 = vsub.f32 %v492, %v509
        %v514 = vsub.f32 %v493, %v510
        %v515 = vsub.f32 %v494, %v511
        %v516 = vsub.f32 %v495, %v512
        %v517 = vmul.f32 %v513, 1.442695
        %v518 = vpow.pop %v517
        %v519 = vmul.f32 %v514, 1.442695
        %v520 = vpow.pop %v519
        %v521 = vmul.f32 %v515, 1.442695
        %v522 = vpow.pop %v521
        %v523 = vmul.f32 %v516, 1.442695
        %v524 = vpow.pop %v523
        %526 = vset.pattern.permute.xlu0 0
        %527 = vperm.xlu0 %526, %v509
        %v528 = vpop.permute.xlu0 %527
        %531 = vset.pattern.permute.xlu0 0
        %532 = vperm.xlu0 %531, %v510
        %v533 = vpop.permute.xlu0 %532
        %536 = vset.pattern.permute.xlu0 0
        %537 = vperm.xlu0 %536, %v511
        %v538 = vpop.permute.xlu0 %537
        %541 = vset.pattern.permute.xlu0 0
        %542 = vperm.xlu0 %541, %v512
        %v543 = vpop.permute.xlu0 %542
        %v545 = vsub.f32 %v423, %v528
        %v546 = vsub.f32 %v426, %v533
        %v547 = vsub.f32 %v486, %v538
        %v548 = vsub.f32 %v489, %v543
        %v549 = vmul.f32 %v545, 1.442695
        %v550 = vpow.pop %v549
        %v551 = vmul.f32 %v546, 1.442695
        %v552 = vpow.pop %v551
        %v553 = vmul.f32 %v547, 1.442695
        %v554 = vpow.pop %v553
        %v555 = vmul.f32 %v548, 1.442695
        %v556 = vpow.pop %v555
        %v557 = vld [vmem:[#allocation3] sm:$0xff]
        %v558 = vld [vmem:[#allocation3 + $0x8] sm:$0xff]
        %v559 = vld [vmem:[#allocation3 + $0x10] sm:$0xff]
        %v560 = vld [vmem:[#allocation3 + $0x18] sm:$0xff]
        %v561 = vmul.f32 %v518, %v557
        %v562 = vmul.f32 %v520, %v558
        %v563 = vmul.f32 %v522, %v559
        %v564 = vmul.f32 %v524, %v560
        %v565 = vsel %vm496, %v550, 0.0
        %566 = vadd.xlane.f32.xlu0 %v565
        %v567 = vpop.xlane.xlu0 %566
        %v568 = vsel %vm496, %v552, 0.0
        %569 = vadd.xlane.f32.xlu0 %v568
        %v570 = vpop.xlane.xlu0 %569
        %v571 = vsel %vm496, %v554, 0.0
        %572 = vadd.xlane.f32.xlu0 %v571
        %v573 = vpop.xlane.xlu0 %572
        %v574 = vsel %vm496, %v556, 0.0
        %575 = vadd.xlane.f32.xlu0 %v574
        %v576 = vpop.xlane.xlu0 %575
        %v577 = vadd.f32 %v561, %v567
        %v578 = vadd.f32 %v562, %v570
        %v579 = vadd.f32 %v563, %v573
        %v580 = vadd.f32 %v564, %v576
        %vm581 = vcmask 7168
        %582 = vst.msk [vmem:[#allocation3] sm:$0xff] %vm581, %v577
        %583 = vst.msk [vmem:[#allocation3 + $0x8] sm:$0xff] %vm581, %v578
        %584 = vst.msk [vmem:[#allocation3 + $0x10] sm:$0xff] %vm581, %v579
        %585 = vst.msk [vmem:[#allocation3 + $0x18] sm:$0xff] %vm581, %v580
        %586 = vst.msk [vmem:[#allocation2] sm:$0xff] %vm581, %v509
        %587 = vst.msk [vmem:[#allocation2 + $0x8] sm:$0xff] %vm581, %v510
        %588 = vst.msk [vmem:[#allocation2 + $0x10] sm:$0xff] %vm581, %v511
        %589 = vst.msk [vmem:[#allocation2 + $0x18] sm:$0xff] %vm581, %v512
        %v590 = vld [vmem:[%s331] sm:$0xff]
        %v591 = vld [vmem:[%s331 + $0x8] sm:$0xff]
        %v592 = vpack.c.bf16 %v590, %v590
        %v593 = vpack.c.bf16 %v591, %v591
        %v594 = vpack.c.bf16 %v552, %v550
        %v595 = vpack.c.bf16 %v556, %v554
        %v597 = vsel %vm496, %v594, 0
        %v600 = vsel %vm496, %v592, 0
        %602 = vmatprep.subr.bf16.mxu0 0
        %603 = vmatpush1.bf16.xpose.msra.mxu0 %v600
        %604 = vmatprep.subr.bf16.mxu0 0
        %605 = vmatpush1.bf16.xpose.msra.mxu0 0
        %606 = vmatprep.subr.bf16.mxu0 0
        %607 = vmatpush1.bf16.xpose.msra.mxu0 0
        %608 = vmatprep.subr.bf16.mxu0 0
        %609 = vmatpush1.bf16.xpose.msra.mxu0 0
        %610 = vmatprep.subr.bf16.mxu0 0
        %611 = vmatpush1.bf16.xpose.msra.mxu0 0
        %612 = vmatprep.subr.bf16.mxu0 0
        %613 = vmatpush1.bf16.xpose.msra.mxu0 0
        %614 = vmatprep.subr.bf16.mxu0 0
        %615 = vmatpush1.bf16.xpose.msra.mxu0 0
        %616 = vmatprep.subr.bf16.mxu0 0
        %617 = vmatpush1.bf16.xpose.msra.mxu0 0
        %618 = vmatprep.subr.bf16.mxu0 0
        %619 = vmatpush1.bf16.xpose.msra.mxu0 0
        %620 = vmatprep.subr.bf16.mxu0 0
        %621 = vmatpush1.bf16.xpose.msra.mxu0 0
        %622 = vmatprep.subr.bf16.mxu0 0
        %623 = vmatpush1.bf16.xpose.msra.mxu0 0
        %624 = vmatprep.subr.bf16.mxu0 0
        %625 = vmatpush1.bf16.xpose.msra.mxu0 0
        %626 = vmatprep.subr.bf16.mxu0 0
        %627 = vmatpush1.bf16.xpose.msra.mxu0 0
        %628 = vmatprep.subr.bf16.mxu0 0
        %629 = vmatpush1.bf16.xpose.msra.mxu0 0
        %630 = vmatprep.subr.bf16.mxu0 0
        %631 = vmatpush1.bf16.xpose.msra.mxu0 0
        %632 = vmatprep.subr.bf16.mxu0 0
        %633 = vmatpush1.bf16.xpose.msra.mxu0 0
        %634 = vmatprep.mubr.bf16.mxu0 0
        %635 = vmatmul.mubr.bf16.gmra.mrb[0].mxu0 %v597
        %v636 = vpop.f32.mrb[0].mxu0
        %v637 = vadd.f32 0.0, %v636
        %v638 = vpop.f32.mrb[0].mxu0
        %v639 = vpop.f32.mrb[0].mxu0
        %v640 = vadd.f32 0.0, %v639
        %v641 = vpop.f32.mrb[0].mxu0
        %642 = vdwg.mxu0
        %v644 = vsel %vm496, %v595, 0
        %v647 = vsel %vm496, %v593, 0
        %649 = vmatprep.subr.bf16.mxu0 0
        %650 = vmatpush1.bf16.xpose.msra.mxu0 %v647
        %651 = vmatprep.subr.bf16.mxu0 0
        %652 = vmatpush1.bf16.xpose.msra.mxu0 0
        %653 = vmatprep.subr.bf16.mxu0 0
        %654 = vmatpush1.bf16.xpose.msra.mxu0 0
        %655 = vmatprep.subr.bf16.mxu0 0
        %656 = vmatpush1.bf16.xpose.msra.mxu0 0
        %657 = vmatprep.subr.bf16.mxu0 0
        %658 = vmatpush1.bf16.xpose.msra.mxu0 0
        %659 = vmatprep.subr.bf16.mxu0 0
        %660 = vmatpush1.bf16.xpose.msra.mxu0 0
        %661 = vmatprep.subr.bf16.mxu0 0
        %662 = vmatpush1.bf16.xpose.msra.mxu0 0
        %663 = vmatprep.subr.bf16.mxu0 0
        %664 = vmatpush1.bf16.xpose.msra.mxu0 0
        %665 = vmatprep.subr.bf16.mxu0 0
        %666 = vmatpush1.bf16.xpose.msra.mxu0 0
        %667 = vmatprep.subr.bf16.mxu0 0
        %668 = vmatpush1.bf16.xpose.msra.mxu0 0
        %669 = vmatprep.subr.bf16.mxu0 0
        %670 = vmatpush1.bf16.xpose.msra.mxu0 0
        %671 = vmatprep.subr.bf16.mxu0 0
        %672 = vmatpush1.bf16.xpose.msra.mxu0 0
        %673 = vmatprep.subr.bf16.mxu0 0
        %674 = vmatpush1.bf16.xpose.msra.mxu0 0
        %675 = vmatprep.subr.bf16.mxu0 0
        %676 = vmatpush1.bf16.xpose.msra.mxu0 0
        %677 = vmatprep.subr.bf16.mxu0 0
        %678 = vmatpush1.bf16.xpose.msra.mxu0 0
        %679 = vmatprep.subr.bf16.mxu0 0
        %680 = vmatpush1.bf16.xpose.msra.mxu0 0
        %681 = vmatprep.mubr.bf16.mxu0 0
        %682 = vmatmul.mubr.bf16.gmra.mrb[0].mxu0 %v644
        %v683 = vpop.f32.mrb[0].mxu0
        %v684 = vadd.f32 0.0, %v683
        %v685 = vpop.f32.mrb[0].mxu0
        %v686 = vpop.f32.mrb[0].mxu0
        %v687 = vadd.f32 0.0, %v686
        %v688 = vpop.f32.mrb[0].mxu0
        %689 = vdwg.mxu0
        %v690 = vld [vmem:[#allocation4] sm:$0xff]
        %v691 = vld [vmem:[#allocation4 + $0x8] sm:$0xff]
        %v692 = vld [vmem:[#allocation4 + $0x10] sm:$0xff]
        %v693 = vld [vmem:[#allocation4 + $0x18] sm:$0xff]
        %695 = vset.pattern.permute.xlu0 0
        %696 = vperm.xlu0 %695, %v518
        %v697 = vpop.permute.xlu0 %696
        %700 = vset.pattern.permute.xlu0 0
        %701 = vperm.xlu0 %700, %v520
        %v702 = vpop.permute.xlu0 %701
        %705 = vset.pattern.permute.xlu0 0
        %706 = vperm.xlu0 %705, %v522
        %v707 = vpop.permute.xlu0 %706
        %710 = vset.pattern.permute.xlu0 0
        %711 = vperm.xlu0 %710, %v524
        %v712 = vpop.permute.xlu0 %711
        %v714 = vmul.f32 %v697, %v690
        %v715 = vmul.f32 %v702, %v691
        %v716 = vmul.f32 %v707, %v692
        %v717 = vmul.f32 %v712, %v693
        %v718 = vadd.f32 %v714, %v637
        %v719 = vadd.f32 %v715, %v640
        %v720 = vadd.f32 %v716, %v684
        %v721 = vadd.f32 %v717, %v687
        %722 = vst.msk [vmem:[#allocation4] sm:$0xff] %vm380, %v718
        %723 = vst.msk [vmem:[#allocation4 + $0x8] sm:$0xff] %vm380, %v719
        %724 = vst.msk [vmem:[#allocation4 + $0x10] sm:$0xff] %vm380, %v720
        %725 = vst.msk [vmem:[#allocation4 + $0x18] sm:$0xff] %vm380, %v721
        // Predicated region
        $region37: #{tpu_custom_call.1} parent=31 // pred_check
          %p726 = pneg %p336
        $region38: #{tpu_custom_call.1} parent=31 // pred_check_branch
          %728 = sbr.rel (%p726) target = $region40
        $region39: #{tpu_custom_call.1} parent=31 // pred_region
          %v729 = vld [vmem:[#allocation3] sm:$0xff]
          %v730 = vld [vmem:[#allocation3 + $0x8] sm:$0xff]
          %v731 = vld [vmem:[#allocation3 + $0x10] sm:$0xff]
          %v732 = vld [vmem:[#allocation3 + $0x18] sm:$0xff]
          %v733 = vrcp.pop %v729
          %v734 = vrcp.pop %v730
          %v735 = vrcp.pop %v731
          %v736 = vrcp.pop %v732
          %v737 = vld [vmem:[#allocation4] sm:$0xff]
          %v738 = vld [vmem:[#allocation4 + $0x8] sm:$0xff]
          %v739 = vld [vmem:[#allocation4 + $0x10] sm:$0xff]
          %v740 = vld [vmem:[#allocation4 + $0x18] sm:$0xff]
          %742 = vset.pattern.permute.xlu0 0
          %743 = vperm.xlu0 %742, %v733
          %v744 = vpop.permute.xlu0 %743
          %747 = vset.pattern.permute.xlu0 0
          %748 = vperm.xlu0 %747, %v734
          %v749 = vpop.permute.xlu0 %748
          %752 = vset.pattern.permute.xlu0 0
          %753 = vperm.xlu0 %752, %v735
          %v754 = vpop.permute.xlu0 %753
          %757 = vset.pattern.permute.xlu0 0
          %758 = vperm.xlu0 %757, %v736
          %v759 = vpop.permute.xlu0 %758
          %v761 = vmul.f32 %v737, %v744
          %v762 = vmul.f32 %v738, %v749
          %v763 = vmul.f32 %v739, %v754
          %v764 = vmul.f32 %v740, %v759
          %765 = vxpose.xlu0.b32.start [1/16] %v761, 128
          %766 = vxpose.xlu0.b32.cont [2/16] %v762, 128
          %767 = vxpose.xlu0.b32.cont [3/16] 0.0, 128
          %768 = vxpose.xlu0.b32.cont [4/16] 0.0, 128
          %769 = vxpose.xlu0.b32.cont [5/16] 0.0, 128
          %770 = vxpose.xlu0.b32.cont [6/16] 0.0, 128
          %771 = vxpose.xlu0.b32.cont [7/16] 0.0, 128
          %772 = vxpose.xlu0.b32.cont [8/16] 0.0, 128
          %773 = vxpose.xlu0.b32.cont [9/16] 0.0, 128
          %774 = vxpose.xlu0.b32.cont [10/16] 0.0, 128
          %775 = vxpose.xlu0.b32.cont [11/16] 0.0, 128
          %776 = vxpose.xlu0.b32.cont [12/16] 0.0, 128
          %777 = vxpose.xlu0.b32.cont [13/16] 0.0, 128
          %778 = vxpose.xlu0.b32.cont [14/16] 0.0, 128
          %779 = vxpose.xlu0.b32.cont [15/16] 0.0, 128
          %780 = vxpose.xlu0.b32.end [16/16] 0.0, 128
          %v781 = vpop.trf.xlu0
          %v782 = vpop.trf.xlu0
          %v783 = vpop.trf.xlu0
          %v784 = vpop.trf.xlu0
          %v785 = vpop.trf.xlu0
          %v786 = vpop.trf.xlu0
          %v787 = vpop.trf.xlu0
          %v788 = vpop.trf.xlu0
          %v789 = vpop.trf.xlu0
          %v790 = vpop.trf.xlu0
          %v791 = vpop.trf.xlu0
          %v792 = vpop.trf.xlu0
          %v793 = vpop.trf.xlu0
          %v794 = vpop.trf.xlu0
          %v795 = vpop.trf.xlu0
          %v796 = vpop.trf.xlu0
          %797 = vxpose.xlu0.b32.start [1/16] %v763, 128
          %798 = vxpose.xlu0.b32.cont [2/16] %v764, 128
          %799 = vxpose.xlu0.b32.cont [3/16] 0.0, 128
          %800 = vxpose.xlu0.b32.cont [4/16] 0.0, 128
          %801 = vxpose.xlu0.b32.cont [5/16] 0.0, 128
          %802 = vxpose.xlu0.b32.cont [6/16] 0.0, 128
          %803 = vxpose.xlu0.b32.cont [7/16] 0.0, 128
          %804 = vxpose.xlu0.b32.cont [8/16] 0.0, 128
          %805 = vxpose.xlu0.b32.cont [9/16] 0.0, 128
          %806 = vxpose.xlu0.b32.cont [10/16] 0.0, 128
          %807 = vxpose.xlu0.b32.cont [11/16] 0.0, 128
          %808 = vxpose.xlu0.b32.cont [12/16] 0.0, 128
          %809 = vxpose.xlu0.b32.cont [13/16] 0.0, 128
          %810 = vxpose.xlu0.b32.cont [14/16] 0.0, 128
          %811 = vxpose.xlu0.b32.cont [15/16] 0.0, 128
          %812 = vxpose.xlu0.b32.end [16/16] 0.0, 128
          %v813 = vpop.trf.xlu0
          %v814 = vpop.trf.xlu0
          %v815 = vpop.trf.xlu0
          %v816 = vpop.trf.xlu0
          %v817 = vpop.trf.xlu0
          %v818 = vpop.trf.xlu0
          %v819 = vpop.trf.xlu0
          %v820 = vpop.trf.xlu0
          %v821 = vpop.trf.xlu0
          %v822 = vpop.trf.xlu0
          %v823 = vpop.trf.xlu0
          %v824 = vpop.trf.xlu0
          %v825 = vpop.trf.xlu0
          %v826 = vpop.trf.xlu0
          %v827 = vpop.trf.xlu0
          %v828 = vpop.trf.xlu0
          %829 = vst.msk [vmem:[%s290] sm:$0xff] %vm496, %v781
          %830 = vst.msk [vmem:[%s290 + $0x8] sm:$0xff] %vm496, %v813
        $region40: #{tpu_custom_call.1} parent=31 // pred_fallthru
          _
        %s831 = sand.u32 %s149, 1
        %s832 = scalar_lea.sflag [#allocation6], %s831
        %s833 = sand.u32 %s149, 1
        %s834 = smul.addr %s833, 16
        %s835 = scalar_lea.vmem [#allocation5], %s834
        // Predicated region
        $region41: #{tpu_custom_call.1} parent=31 // pred_check
          %p836 = pneg %p159
        $region42: #{tpu_custom_call.1} parent=31 // pred_check_branch
          %838 = sbr.rel (%p836) target = $region44
        $region43: #{tpu_custom_call.1} parent=31 // pred_region
          %s839 = smul.u32 2, %s24
          %s841 = ssub.s32 256, 256
          %842 = vsyncadd %s832, %s841
          %s843 = sadd.s32 %s25, %s839
          %s844 = smul.addr %s23, 2
          %s845 = sadd.s32 %s843, %s844
          %s846 = smul.addr %s845, 128
          %s847 = scalar_lea.hbm %s3, %s846
          %s848 = sshll.u32 %s835, 4
          %s849 = int_to_ptr.vmem [resolvable:$true] %s848
          %854 = dma.vmem_to_hbm [thread:$0]  %s849, 256, %s847, %s832, 128, 128, 8
        $region44: #{tpu_custom_call.1} parent=31 // pred_fallthru
          _
      $region32: #{tpu_custom_call.1} parent=5 // pred_fallthru
        _
      %p855 = scmp.le.s32.totalorder 2, %s12
      // Predicated region
      $region45: #{tpu_custom_call.1} parent=5 // pred_check
        %p856 = pneg %p855
      $region46: #{tpu_custom_call.1} parent=5 // pred_check_branch
        %858 = sbr.rel (%p856) target = $region48
      $region47: #{tpu_custom_call.1} parent=5 // pred_region
        %s859 = ssub.s32 %s12, 2
        // Predicated region
        $region49: #{tpu_custom_call.1} parent=47 // pred_check
          %p860 = pneg %p165
        $region50: #{tpu_custom_call.1} parent=47 // pred_check_branch
          %862 = sbr.rel (%p860) target = $region52
        $region51: #{tpu_custom_call.1} parent=47 // pred_region
          %s863 = sand.u32 %s150, 1
          %s864 = scalar_lea.sflag [#allocation6], %s863
          %s865 = sand.u32 %s150, 1
          %s866 = smul.addr %s865, 16
          %s867 = scalar_lea.vmem [#allocation5], %s866
          %868 = dma.done %s864, 256
        $region52: #{tpu_custom_call.1} parent=47 // pred_fallthru
          _
      $region48: #{tpu_custom_call.1} parent=5 // pred_fallthru
        _
    $region6: #{tpu_custom_call.1} parent=1 // loop_footer
      %s16 = sadd.s32 1, %s12
    $region7: #{tpu_custom_call.1} parent=1 // loop_footer_branch
      %11 = sbr.rel target = $region3
    $region8: #{tpu_custom_call.1} parent=1 // loop_exit
      _
    %869 = vsyncpa [#allocation6], 1
    %s870 = scalar_lea.sflag [#allocation6], 1
    %871 = vsyncpa %s870, 1

</llo_original>
